<compile_context>
chip_gen: v7x
topology: tpu7x:2x2x1
jax: 0.10.0
libtpu: 0.0.40
codegen_flags: <defaults>
</compile_context>

<pallas_src>
import jax
import jax.numpy as jnp
from jax import lax
from jax.experimental import pallas as pl
from jax.experimental.pallas import tpu as pltpu


# ---------------------------------------------------------------------------
# kernel: one (TM, C) row-tile per grid step
# ---------------------------------------------------------------------------
def _biasfree_layernorm_kernel(x_ref, w_ref, o_ref):
    x = x_ref[...].astype(jnp.float32)                          # (TM, C)
    w = w_ref[...].astype(jnp.float32)                          # (1, C)
    mu = jnp.mean(x, axis=-1, keepdims=True)                    # (TM, 1)
    var = jnp.mean(jnp.square(x - mu), axis=-1, keepdims=True)  # biased var
    inv = lax.rsqrt(var + 1e-5)                                 # EUP rsqrt, no VPU divide
    o_ref[...] = (x * inv * w).astype(o_ref.dtype)


# ---------------------------------------------------------------------------
# tile sizing helpers
# ---------------------------------------------------------------------------
def _tile_byte_target():
    """Target bytes per input tile, scaled up on v7x (faster HBM -> bigger tiles
    needed to amortize the fixed ~0.35us per-grid-step overhead)."""
    try:
        kind = jax.devices()[0].device_kind.lower()
    except Exception:
        return 2 << 20
    if "v7" in kind:
        return 4 << 20
    return 2 << 20


def _pick_block_rows(n, c, itemsize, target_bytes):
    """Rows per tile: sized by bytes, multiple of 8, capped so grid has >=2 steps
    when there is enough work (keeps both v7x TensorCores busy)."""
    rows = max(1, target_bytes // max(1, c * itemsize))
    rows = max(8, (rows // 8) * 8)
    if n >= 16:
        half = -(-n // 2)                       # ceil(n/2)
        rows = min(rows, ((half + 7) // 8) * 8)
    if rows >= n:
        return n                                # full-extent block (always legal)
    return rows


# ---------------------------------------------------------------------------
# wrapper: flatten leading dims, ragged row tiling, no pad / no slice
# ---------------------------------------------------------------------------
@jax.jit
def biasfree_layernorm(x, weight):
    orig_shape = x.shape
    c = orig_shape[-1]
    x2 = x.reshape(-1, c)
    n = x2.shape[0]

    itemsize = jnp.dtype(x.dtype).itemsize
    tm = _pick_block_rows(n, c, itemsize, _tile_byte_target())
    grid = (pl.cdiv(n, tm),)                    # ragged last block handled by Pallas

    tile_bytes = tm * c * itemsize
    # 2 input + 2 output double-buffers + resident weight + headroom
    vmem_limit = int(min(100 << 20, max(16 << 20, 4 * tile_bytes + (2 << 20))))

    out = pl.pallas_call(
        _biasfree_layernorm_kernel,
        out_shape=jax.ShapeDtypeStruct((n, c), x.dtype),
        grid=grid,
        in_specs=[
            pl.BlockSpec((tm, c), lambda i: (i, 0)),
            pl.BlockSpec((1, c), lambda i: (0, 0)),   # weight, resident across steps
        ],
        out_specs=pl.BlockSpec((tm, c), lambda i: (i, 0)),
        compiler_params=pltpu.CompilerParams(
            dimension_semantics=("parallel",),
            vmem_limit_bytes=vmem_limit,
        ),
    )(x2, weight.reshape(1, c))

    return out.reshape(orig_shape)


# ---------------------------------------------------------------------------
# pure-JAX reference (mirrors the PyTorch forward)
# ---------------------------------------------------------------------------
def reference_forward(x, weight):
    mu = jnp.mean(x, axis=-1, keepdims=True)
    var = jnp.mean(jnp.square(x - mu), axis=-1, keepdims=True)  # unbiased=False
    return x / jnp.sqrt(var + 1e-5) * weight


if __name__ == "__main__":
    key = jax.random.PRNGKey(0)
    k1, k2, k3, k4 = jax.random.split(key, 4)

    # Primary test: Restormer-style (B, H*W, C) tokens, C = normalized_shape.
    B, SEQ, C = 2, 64, 48
    x = jax.random.normal(k1, (B, SEQ, C), jnp.float32)
    # nn.Parameter is ones in the module; use a non-trivial weight here so the
    # weight multiply is actually exercised.
    weight = 1.0 + 0.1 * jax.random.normal(k2, (C,), jnp.float32)

    y = jax.block_until_ready(biasfree_layernorm(x, weight))
    y_ref = reference_forward(x, weight)
    assert y.shape == x.shape
    err = float(jnp.max(jnp.abs(y - y_ref)))
    assert jnp.allclose(y, y_ref, atol=2e-5, rtol=2e-5), err

    # Secondary test: row count (300) not a multiple of the tile -> exercises
    # the pad-free ragged last block.
    x2 = jax.random.normal(k3, (3, 100, 32), jnp.float32)
    w2 = 1.0 + 0.1 * jax.random.normal(k4, (32,), jnp.float32)
    y2 = jax.block_until_ready(biasfree_layernorm(x2, w2))
    y2_ref = reference_forward(x2, w2)
    err2 = float(jnp.max(jnp.abs(y2 - y2_ref)))
    assert jnp.allclose(y2, y2_ref, atol=2e-5, rtol=2e-5), err2

    print("KERNEL_OK")
</pallas_src>

<mosaic_0001>
module attributes {stable_mosaic.version = 11 : i64} {
  func.func @_biasfree_layernorm_kernel(%arg0: i32, %arg1: memref<64x48xf32, #tpu.memory_space<vmem>>, %arg2: memref<1x48xf32, #tpu.memory_space<vmem>>, %arg3: memref<64x48xf32, #tpu.memory_space<vmem>>) attributes {dimension_semantics = [#tpu.dimension_semantics<parallel>], iteration_bounds = array<i64: 2>, scalar_prefetch = 0 : i64, scratch_operands = 0 : i64, tpu.core_type = #tpu.core_type<tc>, window_params = [{transform_indices = @transform_0, window_bounds = array<i64: 64, 48>}, {pipeline_mode = #tpu.pipeline_mode<synchronous>, transform_indices = @transform_1, window_bounds = array<i64: 1, 48>}, {transform_indices = @transform_2, window_bounds = array<i64: 64, 48>}]} {
    %c0 = arith.constant 0 : index
    %c0_0 = arith.constant 0 : index
    %0 = vector.load %arg1[%c0, %c0_0] : memref<64x48xf32, #tpu.memory_space<vmem>>, vector<64x48xf32>
    %c0_1 = arith.constant 0 : index
    %c0_2 = arith.constant 0 : index
    %1 = vector.load %arg2[%c0_1, %c0_2] : memref<1x48xf32, #tpu.memory_space<vmem>>, vector<1x48xf32>
    %cst = arith.constant dense<0.000000e+00> : vector<64xf32>
    %2 = vector.multi_reduction <add>, %0, %cst [1] : vector<64x48xf32> to vector<64xf32>
    %3 = vector.shape_cast %2 : vector<64xf32> to vector<64x1xf32>
    %cst_3 = arith.constant 4.800000e+01 : f32
    %4 = vector.broadcast %cst_3 : f32 to vector<64x1xf32>
    %5 = arith.divf %3, %4 : vector<64x1xf32>
    %6 = vector.broadcast %5 : vector<64x1xf32> to vector<64x48xf32>
    %7 = arith.subf %0, %6 : vector<64x48xf32>
    %8 = arith.mulf %7, %7 : vector<64x48xf32>
    %cst_4 = arith.constant dense<0.000000e+00> : vector<64xf32>
    %9 = vector.multi_reduction <add>, %8, %cst_4 [1] : vector<64x48xf32> to vector<64xf32>
    %10 = vector.shape_cast %9 : vector<64xf32> to vector<64x1xf32>
    %cst_5 = arith.constant 4.800000e+01 : f32
    %11 = vector.broadcast %cst_5 : f32 to vector<64x1xf32>
    %12 = arith.divf %10, %11 : vector<64x1xf32>
    %cst_6 = arith.constant 9.99999974E-6 : f32
    %13 = vector.broadcast %cst_6 : f32 to vector<64x1xf32>
    %14 = arith.addf %12, %13 : vector<64x1xf32>
    %15 = math.rsqrt %14 : vector<64x1xf32>
    %16 = vector.broadcast %15 : vector<64x1xf32> to vector<64x48xf32>
    %17 = arith.mulf %0, %16 : vector<64x48xf32>
    %18 = vector.broadcast %1 : vector<1x48xf32> to vector<64x48xf32>
    %19 = arith.mulf %17, %18 : vector<64x48xf32>
    %c0_7 = arith.constant 0 : index
    %c0_8 = arith.constant 0 : index
    %20 = vector.load %arg3[%c0_7, %c0_8] : memref<64x48xf32, #tpu.memory_space<vmem>>, vector<64x48xf32>
    tpu.vector_store %arg3[%c0_7, %c0_8], %19 {strides = array<i32>} : memref<64x48xf32, #tpu.memory_space<vmem>>, vector<64x48xf32>,
    return
  }
  func.func @transform_0(%arg0: i32) -> (i32, i32) {
    %c0_i32 = arith.constant 0 : i32
    %c0_i32_0 = arith.constant 0 : i32
    return %arg0, %c0_i32 : i32, i32
  }
  func.func @transform_1(%arg0: i32) -> (i32, i32) {
    %c0_i32 = arith.constant 0 : i32
    %c0_i32_0 = arith.constant 0 : i32
    %c0_i32_1 = arith.constant 0 : i32
    return %c0_i32, %c0_i32_0 : i32, i32
  }
  func.func @transform_2(%arg0: i32) -> (i32, i32) {
    %c0_i32 = arith.constant 0 : i32
    %c0_i32_0 = arith.constant 0 : i32
    return %arg0, %c0_i32 : i32, i32
  }
}

</mosaic_0001>

<llo_original>
// kernel: biasfree_layernorm.1
$region0: #{biasfree_layernorm.1}
  #allocation0 [shape = 'u32[]', space=smem, size = 0x4, offset = 0x4, fixed_abs, tag = 'smem constant byte address 0x4 - core index']
  #allocation1 [shape = 'u32[144,128]{1,0:T(1,128)}', space=vmem, size = 0x12000, scoped, tag = 'internal scratch']
  %s0 = inlined_call_operand.vmem [shape: f32[128,48], index: 0, kind: input, shape index: {}]
  %s1 = inlined_call_operand.vmem [shape: f32[1,48], index: 1, kind: input, shape index: {}]
  %s2 = inlined_call_operand.vmem [shape: f32[128,48], index: 2, kind: output, shape index: {}]
  %s3 = sld [smem:[#allocation0]]
  $region41: #{biasfree_layernorm.1} parent=0
    _
  %s5 = ssub.s32 1, %s3
  %s6 = scalar_select 0, %s5, %s3
  loop: start=0, step=1, limit=4
  $region2: #{biasfree_layernorm.1} parent=0 // loop_pre_header
    _
  $region3: #{biasfree_layernorm.1} parent=0 // loop_header
    %s8 = sphi 0, %s12
    %p9 = scmp.ge.s32.totalorder %s8, 4
    %s18 = sphi 0, %s20
    %s21 = sphi 0, %s18
    %s22 = sphi 0, %s21
    %s38 = sphi 0, %s22
    %s42 = sphi 0, %s42
    %s44 = sphi 0, %s42
    %s45 = sphi 0, %s44
    %s59 = sphi 0, %s45
    %s65 = sphi 0, %s67
    %s68 = sphi 0, %s65
    %s69 = sphi 0, %s68
    %s85 = sphi 0, %s69
  $region4: #{biasfree_layernorm.1} parent=0 // loop_header_branch
    %11 = sbr.rel (%p9) target = $region8
  $region5: #{biasfree_layernorm.1} parent=0 // loop_body
    %s13 = ssub.s32 %s8, 1
    %s14 = ssub.s32 %s8, 2
    %s15 = sadd.s32 %s8, 1
    %s16 = ssub.s32 %s8, %s15
    %p17 = scmp.eq.s32.totalorder %s16, 0
    %s19 = sadd.s32 %s18, 1
    %s20 = scalar_select %p17, %s18, %s19
    %p23 = pneg %p17
    %p24 = scmp.eq.s32.totalorder %s8, 1
    %p25 = por %p23, %p24
    %p26 = scmp.ne.s32.totalorder %s18, %s21
    %p27 = scmp.eq.s32.totalorder %s8, 0
    %p28 = por %p26, %p27
    %p29 = scmp.ne.s32.totalorder %s18, %s21
    %p30 = scmp.eq.s32.totalorder %s13, 1
    %p31 = por %p29, %p30
    %p32 = scmp.ne.s32.totalorder %s21, %s22
    %p33 = scmp.eq.s32.totalorder %s13, 0
    %p34 = por %p32, %p33
    %p35 = scmp.ne.s32.totalorder %s21, %s22
    %p36 = scmp.eq.s32.totalorder %s14, 1
    %p37 = por %p35, %p36
    %p39 = scmp.ne.s32.totalorder %s22, %s38
    %p40 = scmp.eq.s32.totalorder %s14, 0
    %p41 = por %p39, %p40
    %s43 = sadd.s32 %s42, 1
    %p46 = scmp.eq.s32.totalorder %s8, 1
    %p47 = scmp.ne.s32.totalorder %s42, %s44
    %p48 = scmp.eq.s32.totalorder %s8, 0
    %p49 = por %p47, %p48
    %p50 = scmp.ne.s32.totalorder %s42, %s44
    %p51 = scmp.eq.s32.totalorder %s13, 1
    %p52 = por %p50, %p51
    %p53 = scmp.ne.s32.totalorder %s44, %s45
    %p54 = scmp.eq.s32.totalorder %s13, 0
    %p55 = por %p53, %p54
    %p56 = scmp.ne.s32.totalorder %s44, %s45
    %p57 = scmp.eq.s32.totalorder %s14, 1
    %p58 = por %p56, %p57
    %p60 = scmp.ne.s32.totalorder %s45, %s59
    %p61 = scmp.eq.s32.totalorder %s14, 0
    %p62 = por %p60, %p61
    %s63 = ssub.s32 %s8, %s15
    %p64 = scmp.eq.s32.totalorder %s63, 0
    %s66 = sadd.s32 %s65, 1
    %s67 = scalar_select %p64, %s65, %s66
    %p70 = pneg %p64
    %p71 = scmp.eq.s32.totalorder %s8, 1
    %p72 = por %p70, %p71
    %p73 = scmp.ne.s32.totalorder %s65, %s68
    %p74 = scmp.eq.s32.totalorder %s8, 0
    %p75 = por %p73, %p74
    %p76 = scmp.ne.s32.totalorder %s65, %s68
    %p77 = scmp.eq.s32.totalorder %s13, 1
    %p78 = por %p76, %p77
    %p79 = scmp.ne.s32.totalorder %s68, %s69
    %p80 = scmp.eq.s32.totalorder %s13, 0
    %p81 = por %p79, %p80
    %p82 = scmp.ne.s32.totalorder %s68, %s69
    %p83 = scmp.eq.s32.totalorder %s14, 1
    %p84 = por %p82, %p83
    %p86 = scmp.ne.s32.totalorder %s69, %s85
    %p87 = scmp.eq.s32.totalorder %s14, 0
    %p88 = por %p86, %p87
    %p89 = scmp.le.s32.totalorder 1, %s8
    %p90 = scmp.lt.s32.totalorder %s8, 3
    %p91 = pnand %p89, %p90
    %p92 = pneg %p91
    // Predicated region
    $region9: #{biasfree_layernorm.1} parent=5 // pred_check
      _
    $region10: #{biasfree_layernorm.1} parent=5 // pred_check_branch
      %94 = sbr.rel (%p91) target = $region12
    $region11: #{biasfree_layernorm.1} parent=5 // pred_region
      %s95 = ssub.s32 %s8, 1
      // Predicated region
      $region13: #{biasfree_layernorm.1} parent=11 // pred_check
        %p96 = pneg %p55
      $region14: #{biasfree_layernorm.1} parent=11 // pred_check_branch
        %98 = sbr.rel (%p96) target = $region16
      $region15: #{biasfree_layernorm.1} parent=11 // pred_region
        _
      $region16: #{biasfree_layernorm.1} parent=11 // pred_fallthru
        _
    $region12: #{biasfree_layernorm.1} parent=5 // pred_fallthru
      _
    %p99 = scmp.lt.s32.totalorder %s8, 2
    // Predicated region
    $region17: #{biasfree_layernorm.1} parent=5 // pred_check
      %p100 = pneg %p99
    $region18: #{biasfree_layernorm.1} parent=5 // pred_check_branch
      %102 = sbr.rel (%p100) target = $region20
    $region19: #{biasfree_layernorm.1} parent=5 // pred_region
      // Predicated region
      $region21: #{biasfree_layernorm.1} parent=19 // pred_check
        %p103 = pneg %p28
      $region22: #{biasfree_layernorm.1} parent=19 // pred_check_branch
        %105 = sbr.rel (%p103) target = $region24
      $region23: #{biasfree_layernorm.1} parent=19 // pred_region
        %s106 = smul.u32 8, %s8
        %p107 = scmp.lt.s32.totalorder %s106, 15
        %s108 = scalar_select %p107, %s106, 15
        %s109 = smul.addr %s108, 8
        %s110 = scalar_lea.vmem %s0, %s109
        %s111 = smul.u32 8, %s8
      $region24: #{biasfree_layernorm.1} parent=19 // pred_fallthru
        _
    $region20: #{biasfree_layernorm.1} parent=5 // pred_fallthru
      _
    %p112 = scmp.le.s32.totalorder 1, %s8
    %p113 = scmp.lt.s32.totalorder %s8, 3
    %p114 = pnand %p112, %p113
    %p115 = pneg %p114
    // Predicated region
    $region25: #{biasfree_layernorm.1} parent=5 // pred_check
      _
    $region26: #{biasfree_layernorm.1} parent=5 // pred_check_branch
      %117 = sbr.rel (%p114) target = $region28
    $region27: #{biasfree_layernorm.1} parent=5 // pred_region
      %s118 = ssub.s32 %s8, 1
      %s119 = smul.u32 8, %s13
      %p120 = scmp.lt.s32.totalorder %s119, 15
      %s121 = scalar_select %p120, %s119, 15
      %s122 = smul.addr %s121, 8
      %s123 = scalar_lea.vmem %s0, %s122
      %p124 = pneg %p34
      %p125 = pneg %p31
      %p126 = pneg %p55
      %p127 = pneg %p52
      %p128 = pneg %p81
      %p129 = pneg %p78
      %s130 = smul.u32 8, %s13
      %p131 = scmp.lt.s32.totalorder %s130, 15
      %s132 = scalar_select %p131, %s130, 15
      %s133 = smul.addr %s132, 8
      %s134 = scalar_lea.vmem %s2, %s133
      %s135 = smul.u32 8, %s13
      %p136 = scmp.lt.s32.totalorder %s135, 15
      %s137 = scalar_select %p136, %s135, 15
      %s138 = smul.addr %s137, 8
      %s139 = scalar_lea.vmem %s0, %s138
      %s140 = smul.u32 8, %s13
      %s141 = smul.u32 8, %s13
      %p142 = scmp.lt.s32.totalorder %s141, 15
      %s143 = scalar_select %p142, %s141, 15
      %s144 = smul.addr %s143, 8
      %s145 = scalar_lea.vmem %s2, %s144
      %s146 = smul.u32 8, %s13
      %v147 = vld [vmem:[%s139] sm:$0xff]
      %v148 = vld [vmem:[%s139 + $0x8] sm:$0xff]
      %v149 = vld [vmem:[%s139 + $0x10] sm:$0xff]
      %v150 = vld [vmem:[%s139 + $0x18] sm:$0xff]
      %v151 = vld [vmem:[%s139 + $0x20] sm:$0xff]
      %v152 = vld [vmem:[%s139 + $0x28] sm:$0xff]
      %v153 = vld [vmem:[%s139 + $0x30] sm:$0xff]
      %v154 = vld [vmem:[%s139 + $0x38] sm:$0xff]
      %v155 = vld [vmem:[%s1] sm:$0x1]
      %vm156 = vcmask 392192
      %v157 = vsel %vm156, %v147, 0.0
      %158 = vadd.xlane.f32.xlu0 %v157
      %v159 = vpop.xlane.xlu0 %158
      %v160 = vsel %vm156, %v148, 0.0
      %161 = vadd.xlane.f32.xlu0 %v160
      %v162 = vpop.xlane.xlu0 %161
      %v163 = vsel %vm156, %v149, 0.0
      %164 = vadd.xlane.f32.xlu0 %v163
      %v165 = vpop.xlane.xlu0 %164
      %v166 = vsel %vm156, %v150, 0.0
      %167 = vadd.xlane.f32.xlu0 %v166
      %v168 = vpop.xlane.xlu0 %167
      %v169 = vsel %vm156, %v151, 0.0
      %170 = vadd.xlane.f32.xlu0 %v169
      %v171 = vpop.xlane.xlu0 %170
      %v172 = vsel %vm156, %v152, 0.0
      %173 = vadd.xlane.f32.xlu0 %v172
      %v174 = vpop.xlane.xlu0 %173
      %v175 = vsel %vm156, %v153, 0.0
      %176 = vadd.xlane.f32.xlu0 %v175
      %v177 = vpop.xlane.xlu0 %176
      %v178 = vsel %vm156, %v154, 0.0
      %179 = vadd.xlane.f32.xlu0 %v178
      %v180 = vpop.xlane.xlu0 %179
      %v181 = vrcp.pop 48.0
      %v182 = vmul.f32 %v159, %v181
      %v183 = vmul.f32 %v162, %v181
      %v184 = vmul.f32 %v165, %v181
      %v185 = vmul.f32 %v168, %v181
      %v186 = vmul.f32 %v171, %v181
      %v187 = vmul.f32 %v174, %v181
      %v188 = vmul.f32 %v177, %v181
      %v189 = vmul.f32 %v180, %v181
      %v190 = vsub.f32 %v147, %v182
      %v191 = vsub.f32 %v148, %v183
      %v192 = vsub.f32 %v149, %v184
      %v193 = vsub.f32 %v150, %v185
      %v194 = vsub.f32 %v151, %v186
      %v195 = vsub.f32 %v152, %v187
      %v196 = vsub.f32 %v153, %v188
      %v197 = vsub.f32 %v154, %v189
      %v198 = vmul.f32 %v190, %v190
      %v199 = vmul.f32 %v191, %v191
      %v200 = vmul.f32 %v192, %v192
      %v201 = vmul.f32 %v193, %v193
      %v202 = vmul.f32 %v194, %v194
      %v203 = vmul.f32 %v195, %v195
      %v204 = vmul.f32 %v196, %v196
      %v205 = vmul.f32 %v197, %v197
      %v206 = vsel %vm156, %v198, 0.0
      %207 = vadd.xlane.f32.xlu0 %v206
      %v208 = vpop.xlane.xlu0 %207
      %v209 = vsel %vm156, %v199, 0.0
      %210 = vadd.xlane.f32.xlu0 %v209
      %v211 = vpop.xlane.xlu0 %210
      %v212 = vsel %vm156, %v200, 0.0
      %213 = vadd.xlane.f32.xlu0 %v212
      %v214 = vpop.xlane.xlu0 %213
      %v215 = vsel %vm156, %v201, 0.0
      %216 = vadd.xlane.f32.xlu0 %v215
      %v217 = vpop.xlane.xlu0 %216
      %v218 = vsel %vm156, %v202, 0.0
      %219 = vadd.xlane.f32.xlu0 %v218
      %v220 = vpop.xlane.xlu0 %219
      %v221 = vsel %vm156, %v203, 0.0
      %222 = vadd.xlane.f32.xlu0 %v221
      %v223 = vpop.xlane.xlu0 %222
      %v224 = vsel %vm156, %v204, 0.0
      %225 = vadd.xlane.f32.xlu0 %v224
      %v226 = vpop.xlane.xlu0 %225
      %v227 = vsel %vm156, %v205, 0.0
      %228 = vadd.xlane.f32.xlu0 %v227
      %v229 = vpop.xlane.xlu0 %228
      %v230 = vmul.f32 %v208, %v181
      %v231 = vmul.f32 %v211, %v181
      %v232 = vmul.f32 %v214, %v181
      %v233 = vmul.f32 %v217, %v181
      %v234 = vmul.f32 %v220, %v181
      %v235 = vmul.f32 %v223, %v181
      %v236 = vmul.f32 %v226, %v181
      %v237 = vmul.f32 %v229, %v181
      %v238 = vadd.f32 %v230, 1e-05
      %v239 = vadd.f32 %v231, 1e-05
      %v240 = vadd.f32 %v232, 1e-05
      %v241 = vadd.f32 %v233, 1e-05
      %v242 = vadd.f32 %v234, 1e-05
      %v243 = vadd.f32 %v235, 1e-05
      %v244 = vadd.f32 %v236, 1e-05
      %v245 = vadd.f32 %v237, 1e-05
      %v246 = vrsqrt.pop %v238
      %v247 = vrsqrt.pop %v239
      %v248 = vrsqrt.pop %v240
      %v249 = vrsqrt.pop %v241
      %v250 = vrsqrt.pop %v242
      %v251 = vrsqrt.pop %v243
      %v252 = vrsqrt.pop %v244
      %v253 = vrsqrt.pop %v245
      %v254 = vmul.f32 %v147, %v246
      %v255 = vmul.f32 %v148, %v247
      %v256 = vmul.f32 %v149, %v248
      %v257 = vmul.f32 %v150, %v249
      %v258 = vmul.f32 %v151, %v250
      %v259 = vmul.f32 %v152, %v251
      %v260 = vmul.f32 %v153, %v252
      %v261 = vmul.f32 %v154, %v253
      %v263 = vlaneseq
      %v264 = vshrl.u32 %v263, 7
      %v265 = vsub.s32 0, %v264
      %v266 = vrot.slane %v155, %v265
      %v268 = vmul.f32 %v254, %v266
      %v269 = vmul.f32 %v255, %v266
      %v270 = vmul.f32 %v256, %v266
      %v271 = vmul.f32 %v257, %v266
      %v272 = vmul.f32 %v258, %v266
      %v273 = vmul.f32 %v259, %v266
      %v274 = vmul.f32 %v260, %v266
      %v275 = vmul.f32 %v261, %v266
      %276 = vst.msk [vmem:[%s145] sm:$0xff] %vm156, %v268
      %277 = vst.msk [vmem:[%s145 + $0x8] sm:$0xff] %vm156, %v269
      %278 = vst.msk [vmem:[%s145 + $0x10] sm:$0xff] %vm156, %v270
      %279 = vst.msk [vmem:[%s145 + $0x18] sm:$0xff] %vm156, %v271
      %280 = vst.msk [vmem:[%s145 + $0x20] sm:$0xff] %vm156, %v272
      %281 = vst.msk [vmem:[%s145 + $0x28] sm:$0xff] %vm156, %v273
      %282 = vst.msk [vmem:[%s145 + $0x30] sm:$0xff] %vm156, %v274
      %283 = vst.msk [vmem:[%s145 + $0x38] sm:$0xff] %vm156, %v275
      %s284 = smul.u32 8, %s13
      %p285 = scmp.lt.s32.totalorder %s284, 15
      %s286 = scalar_select %p285, %s284, 15
      %s287 = smul.addr %s286, 8
      %s288 = scalar_lea.vmem %s2, %s287
      // Predicated region
      $region29: #{biasfree_layernorm.1} parent=27 // pred_check
        %p289 = pneg %p78
      $region30: #{biasfree_layernorm.1} parent=27 // pred_check_branch
        %291 = sbr.rel (%p289) target = $region32
      $region31: #{biasfree_layernorm.1} parent=27 // pred_region
        %s292 = smul.u32 8, %s13
      $region32: #{biasfree_layernorm.1} parent=27 // pred_fallthru
        _
    $region28: #{biasfree_layernorm.1} parent=5 // pred_fallthru
      _
    %p293 = scmp.le.s32.totalorder 2, %s8
    // Predicated region
    $region33: #{biasfree_layernorm.1} parent=5 // pred_check
      %p294 = pneg %p293
    $region34: #{biasfree_layernorm.1} parent=5 // pred_check_branch
      %296 = sbr.rel (%p294) target = $region36
    $region35: #{biasfree_layernorm.1} parent=5 // pred_region
      %s297 = ssub.s32 %s8, 2
      // Predicated region
      $region37: #{biasfree_layernorm.1} parent=35 // pred_check
        %p298 = pneg %p84
      $region38: #{biasfree_layernorm.1} parent=35 // pred_check_branch
        %300 = sbr.rel (%p298) target = $region40
      $region39: #{biasfree_layernorm.1} parent=35 // pred_region
        %s301 = smul.u32 8, %s14
        %p302 = scmp.lt.s32.totalorder %s301, 15
        %s303 = scalar_select %p302, %s301, 15
        %s304 = smul.addr %s303, 8
        %s305 = scalar_lea.vmem %s2, %s304
      $region40: #{biasfree_layernorm.1} parent=35 // pred_fallthru
        _
    $region36: #{biasfree_layernorm.1} parent=5 // pred_fallthru
      _
  $region6: #{biasfree_layernorm.1} parent=0 // loop_footer
    %s12 = sadd.s32 1, %s8
  $region7: #{biasfree_layernorm.1} parent=0 // loop_footer_branch
    %7 = sbr.rel target = $region3
  $region8: #{biasfree_layernorm.1} parent=0 // loop_exit
    _

</llo_original>
